<compile_context>
chip_gen: v5e
topology: v5e:2x2
jax: 0.10.0
libtpu: 0.0.40
codegen_flags: <defaults>
</compile_context>

<pallas_src>
import math
import functools

import jax
import jax.numpy as jnp
from jax.experimental import pallas as pl
from jax.experimental.pallas import tpu as pltpu


LAYER_DIMS = [187, 64, 16]   # default layer_dims from the PyTorch module

_TB_MAX = 2048               # max batch-tile rows (fits VMEM on v5e/v6e/v7x)
_MIN_SPLIT = 512             # above this batch, force >= 2 grid steps (v7x megacore)


def _round_up(n, m):
    return ((n + m - 1) // m) * m


def _gelu_exact(x):
    # PyTorch nn.GELU() default = exact erf formulation.
    return 0.5 * x * (1.0 + jax.lax.erf(x * (1.0 / math.sqrt(2.0))))


def _make_autoencoder_kernel(n_enc_layers, n_dec_layers, use_bf16_matmul):
    """Builds a kernel: refs = (x, [w,b]*n_enc, [w,b]*n_dec, out)."""
    mm_dtype = jnp.bfloat16 if use_bf16_matmul else jnp.float32

    def kernel(*refs):
        x_ref = refs[0]
        out_ref = refs[-1]
        params = refs[1:-1]

        h = x_ref[...].astype(jnp.float32)

        def linear(h, w_ref, b_ref):
            w = w_ref[...].astype(mm_dtype)
            b = b_ref[...].astype(jnp.float32)
            y = jnp.dot(h.astype(mm_dtype), w,
                        preferred_element_type=jnp.float32)
            return y + b

        idx = 0
        # encoder: GELU after every Linear except the last
        for i in range(n_enc_layers):
            h = linear(h, params[idx], params[idx + 1])
            idx += 2
            if i < n_enc_layers - 1:
                h = _gelu_exact(h)
        # decoder: GELU after every Linear except the last
        for i in range(n_dec_layers):
            h = linear(h, params[idx], params[idx + 1])
            idx += 2
            if i < n_dec_layers - 1:
                h = _gelu_exact(h)

        out_ref[...] = h.astype(out_ref.dtype)

    return kernel


def init_params(layer_dims, key):
    """Deterministic init mimicking nn.Linear's uniform(-1/sqrt(in), 1/sqrt(in)).

    Returns a flat list [w, b, w, b, ...] for encoder layers followed by
    decoder layers. Weights are stored as (in_dim, out_dim); biases as
    (1, out_dim).
    """
    params = []

    def add_linear(key, in_dim, out_dim):
        kw, kb = jax.random.split(key)
        bound = 1.0 / math.sqrt(in_dim)
        w = jax.random.uniform(kw, (in_dim, out_dim), jnp.float32, -bound, bound)
        b = jax.random.uniform(kb, (1, out_dim), jnp.float32, -bound, bound)
        params.append(w)
        params.append(b)

    # encoder
    for in_dim, out_dim in zip(layer_dims[:-1], layer_dims[1:]):
        key, sub = jax.random.split(key)
        add_linear(sub, in_dim, out_dim)
    # decoder (reversed dims)
    rev = layer_dims[::-1]
    for in_dim, out_dim in zip(rev[:-1], rev[1:]):
        key, sub = jax.random.split(key)
        add_linear(sub, in_dim, out_dim)
    return params


@functools.partial(jax.jit, static_argnames=("layer_dims", "use_bf16_matmul"))
def mlp_autoencoder_forward(x, params, layer_dims=tuple(LAYER_DIMS),
                            use_bf16_matmul=False):
    B, F = x.shape
    assert F == layer_dims[0], (F, layer_dims)
    n_layers = len(layer_dims) - 1
    out_dim = layer_dims[0]

    params = list(params)

    # --- batch tiling (no jnp.pad; partial last block handled by Pallas) ----
    TB = min(_TB_MAX, _round_up(B, 8))
    if B > _MIN_SPLIT:
        # ensure >= 2 grid steps so the "parallel" axis can use both TCs (v7x)
        TB = min(TB, _round_up(pl.cdiv(B, 2), 8))
    grid = (pl.cdiv(B, TB),)

    # --- specs ---------------------------------------------------------------
    # Input feature dim (187) is intentionally NOT padded: last block dim ==
    # full array dim is legal and the HBM slab stays contiguous.
    x_spec = pl.BlockSpec((TB, F), lambda i: (i, 0))
    # Weights/biases: full-array blocks, same block index every step ->
    # they stay resident in VMEM across the batch grid.
    param_specs = [pl.BlockSpec(p.shape, lambda i: (0, 0)) for p in params]
    # Output written at its natural width (no column padding, no wrapper slice).
    out_spec = pl.BlockSpec((TB, out_dim), lambda i: (i, 0))

    # --- advisory cost estimate ----------------------------------------------
    dims_enc = list(zip(layer_dims[:-1], layer_dims[1:]))
    dims_dec = list(zip(layer_dims[::-1][:-1], layer_dims[::-1][1:]))
    flops = 2 * B * sum(i * o for i, o in dims_enc + dims_dec)
    gelu_elems = B * (sum(o for _, o in dims_enc[:-1])
                      + sum(o for _, o in dims_dec[:-1]))
    bytes_accessed = (x.size * x.dtype.itemsize
                      + B * out_dim * jnp.dtype(x.dtype).itemsize
                      + sum(p.size * p.dtype.itemsize for p in params))
    cost = pl.CostEstimate(flops=int(flops),
                           transcendentals=int(gelu_elems),
                           bytes_accessed=int(bytes_accessed))

    kernel = _make_autoencoder_kernel(n_layers, n_layers, use_bf16_matmul)

    out = pl.pallas_call(
        kernel,
        out_shape=jax.ShapeDtypeStruct((B, out_dim), x.dtype),
        grid=grid,
        in_specs=[x_spec] + param_specs,
        out_specs=out_spec,
        compiler_params=pltpu.CompilerParams(
            dimension_semantics=("parallel",),
            vmem_limit_bytes=32 * 1024 * 1024),
        cost_estimate=cost,
    )(x, *params)

    return out


def _reference_forward(x, params, layer_dims):
    """Pure-JAX reference for correctness checking."""
    n_layers = len(layer_dims) - 1
    h = x.astype(jnp.float32)
    idx = 0
    for i in range(n_layers):                 # encoder
        w, b = params[idx], params[idx + 1]
        idx += 2
        h = h @ w + b
        if i < n_layers - 1:
            h = _gelu_exact(h)
    for i in range(n_layers):                 # decoder
        w, b = params[idx], params[idx + 1]
        idx += 2
        h = h @ w + b
        if i < n_layers - 1:
            h = _gelu_exact(h)
    return h.astype(x.dtype)


if __name__ == "__main__":
    key = jax.random.PRNGKey(0)
    kx, kp = jax.random.split(key)

    batch = 8
    x = jax.random.normal(kx, (batch, LAYER_DIMS[0]), jnp.float32)
    params = init_params(LAYER_DIMS, kp)

    out = mlp_autoencoder_forward(x, params, layer_dims=tuple(LAYER_DIMS))
    out = jax.block_until_ready(out)

    ref = _reference_forward(x, params, LAYER_DIMS)
    assert out.shape == (batch, LAYER_DIMS[0]), out.shape
    assert jnp.allclose(out, ref, atol=1e-4, rtol=1e-4), "mismatch vs reference"

    print("KERNEL_OK")
</pallas_src>

<mosaic_0001>
module attributes {stable_mosaic.version = 11 : i64} {
  func.func @kernel(%arg0: i32, %arg1: memref<8x187xf32, #tpu.memory_space<vmem>>, %arg2: memref<187x64xf32, #tpu.memory_space<vmem>>, %arg3: memref<1x64xf32, #tpu.memory_space<vmem>>, %arg4: memref<64x16xf32, #tpu.memory_space<vmem>>, %arg5: memref<1x16xf32, #tpu.memory_space<vmem>>, %arg6: memref<16x64xf32, #tpu.memory_space<vmem>>, %arg7: memref<1x64xf32, #tpu.memory_space<vmem>>, %arg8: memref<64x187xf32, #tpu.memory_space<vmem>>, %arg9: memref<1x187xf32, #tpu.memory_space<vmem>>, %arg10: memref<8x187xf32, #tpu.memory_space<vmem>>) attributes {dimension_semantics = [#tpu.dimension_semantics<parallel>], iteration_bounds = array<i64: 1>, scalar_prefetch = 0 : i64, scratch_operands = 0 : i64, tpu.core_type = #tpu.core_type<tc>, window_params = [{transform_indices = @transform_0, window_bounds = array<i64: 8, 187>}, {pipeline_mode = #tpu.pipeline_mode<synchronous>, transform_indices = @transform_1, window_bounds = array<i64: 187, 64>}, {pipeline_mode = #tpu.pipeline_mode<synchronous>, transform_indices = @transform_2, window_bounds = array<i64: 1, 64>}, {pipeline_mode = #tpu.pipeline_mode<synchronous>, transform_indices = @transform_3, window_bounds = array<i64: 64, 16>}, {pipeline_mode = #tpu.pipeline_mode<synchronous>, transform_indices = @transform_4, window_bounds = array<i64: 1, 16>}, {pipeline_mode = #tpu.pipeline_mode<synchronous>, transform_indices = @transform_5, window_bounds = array<i64: 16, 64>}, {pipeline_mode = #tpu.pipeline_mode<synchronous>, transform_indices = @transform_6, window_bounds = array<i64: 1, 64>}, {pipeline_mode = #tpu.pipeline_mode<synchronous>, transform_indices = @transform_7, window_bounds = array<i64: 64, 187>}, {pipeline_mode = #tpu.pipeline_mode<synchronous>, transform_indices = @transform_8, window_bounds = array<i64: 1, 187>}, {transform_indices = @transform_9, window_bounds = array<i64: 8, 187>}]} {
    %c0 = arith.constant 0 : index
    %c0_0 = arith.constant 0 : index
    %0 = vector.load %arg1[%c0, %c0_0] : memref<8x187xf32, #tpu.memory_space<vmem>>, vector<8x187xf32>
    %c0_1 = arith.constant 0 : index
    %c0_2 = arith.constant 0 : index
    %1 = vector.load %arg2[%c0_1, %c0_2] : memref<187x64xf32, #tpu.memory_space<vmem>>, vector<187x64xf32>
    %c0_3 = arith.constant 0 : index
    %c0_4 = arith.constant 0 : index
    %2 = vector.load %arg3[%c0_3, %c0_4] : memref<1x64xf32, #tpu.memory_space<vmem>>, vector<1x64xf32>
    %cst = arith.constant dense<0.000000e+00> : vector<8x64xf32>
    %3 = tpu.matmul %0, %1, %cst {dimension_numbers = #tpu.dot_dimension_numbers<[1], [0], [0], [1], [0, 0, 1, 1], [], []>} : vector<8x187xf32>, vector<187x64xf32>, vector<8x64xf32> -> vector<8x64xf32>
    %4 = vector.broadcast %2 : vector<1x64xf32> to vector<8x64xf32>
    %5 = arith.addf %3, %4 : vector<8x64xf32>
    %cst_5 = arith.constant 5.000000e-01 : f32
    %6 = vector.broadcast %cst_5 : f32 to vector<8x64xf32>
    %7 = arith.mulf %6, %5 : vector<8x64xf32>
    %cst_6 = arith.constant 0.707106769 : f32
    %8 = vector.broadcast %cst_6 : f32 to vector<8x64xf32>
    %9 = arith.mulf %5, %8 : vector<8x64xf32>
    %10 = math.erf %9 : vector<8x64xf32>
    %cst_7 = arith.constant 1.000000e+00 : f32
    %11 = vector.broadcast %cst_7 : f32 to vector<8x64xf32>
    %12 = arith.addf %11, %10 : vector<8x64xf32>
    %13 = arith.mulf %7, %12 : vector<8x64xf32>
    %c0_8 = arith.constant 0 : index
    %c0_9 = arith.constant 0 : index
    %14 = vector.load %arg4[%c0_8, %c0_9] : memref<64x16xf32, #tpu.memory_space<vmem>>, vector<64x16xf32>
    %c0_10 = arith.constant 0 : index
    %c0_11 = arith.constant 0 : index
    %15 = vector.load %arg5[%c0_10, %c0_11] : memref<1x16xf32, #tpu.memory_space<vmem>>, vector<1x16xf32>
    %cst_12 = arith.constant dense<0.000000e+00> : vector<8x16xf32>
    %16 = tpu.matmul %13, %14, %cst_12 {dimension_numbers = #tpu.dot_dimension_numbers<[1], [0], [0], [1], [0, 0, 1, 1], [], []>} : vector<8x64xf32>, vector<64x16xf32>, vector<8x16xf32> -> vector<8x16xf32>
    %17 = vector.broadcast %15 : vector<1x16xf32> to vector<8x16xf32>
    %18 = arith.addf %16, %17 : vector<8x16xf32>
    %c0_13 = arith.constant 0 : index
    %c0_14 = arith.constant 0 : index
    %19 = vector.load %arg6[%c0_13, %c0_14] : memref<16x64xf32, #tpu.memory_space<vmem>>, vector<16x64xf32>
    %c0_15 = arith.constant 0 : index
    %c0_16 = arith.constant 0 : index
    %20 = vector.load %arg7[%c0_15, %c0_16] : memref<1x64xf32, #tpu.memory_space<vmem>>, vector<1x64xf32>
    %cst_17 = arith.constant dense<0.000000e+00> : vector<8x64xf32>
    %21 = tpu.matmul %18, %19, %cst_17 {dimension_numbers = #tpu.dot_dimension_numbers<[1], [0], [0], [1], [0, 0, 1, 1], [], []>} : vector<8x16xf32>, vector<16x64xf32>, vector<8x64xf32> -> vector<8x64xf32>
    %22 = vector.broadcast %20 : vector<1x64xf32> to vector<8x64xf32>
    %23 = arith.addf %21, %22 : vector<8x64xf32>
    %cst_18 = arith.constant 5.000000e-01 : f32
    %24 = vector.broadcast %cst_18 : f32 to vector<8x64xf32>
    %25 = arith.mulf %24, %23 : vector<8x64xf32>
    %cst_19 = arith.constant 0.707106769 : f32
    %26 = vector.broadcast %cst_19 : f32 to vector<8x64xf32>
    %27 = arith.mulf %23, %26 : vector<8x64xf32>
    %28 = math.erf %27 : vector<8x64xf32>
    %cst_20 = arith.constant 1.000000e+00 : f32
    %29 = vector.broadcast %cst_20 : f32 to vector<8x64xf32>
    %30 = arith.addf %29, %28 : vector<8x64xf32>
    %31 = arith.mulf %25, %30 : vector<8x64xf32>
    %c0_21 = arith.constant 0 : index
    %c0_22 = arith.constant 0 : index
    %32 = vector.load %arg8[%c0_21, %c0_22] : memref<64x187xf32, #tpu.memory_space<vmem>>, vector<64x187xf32>
    %c0_23 = arith.constant 0 : index
    %c0_24 = arith.constant 0 : index
    %33 = vector.load %arg9[%c0_23, %c0_24] : memref<1x187xf32, #tpu.memory_space<vmem>>, vector<1x187xf32>
    %cst_25 = arith.constant dense<0.000000e+00> : vector<8x187xf32>
    %34 = tpu.matmul %31, %32, %cst_25 {dimension_numbers = #tpu.dot_dimension_numbers<[1], [0], [0], [1], [0, 0, 1, 1], [], []>} : vector<8x64xf32>, vector<64x187xf32>, vector<8x187xf32> -> vector<8x187xf32>
    %35 = vector.broadcast %33 : vector<1x187xf32> to vector<8x187xf32>
    %36 = arith.addf %34, %35 : vector<8x187xf32>
    %c0_26 = arith.constant 0 : index
    %c0_27 = arith.constant 0 : index
    %37 = vector.load %arg10[%c0_26, %c0_27] : memref<8x187xf32, #tpu.memory_space<vmem>>, vector<8x187xf32>
    tpu.vector_store %arg10[%c0_26, %c0_27], %36 {strides = array<i32>} : memref<8x187xf32, #tpu.memory_space<vmem>>, vector<8x187xf32>,
    return
  }
  func.func @transform_0(%arg0: i32) -> (i32, i32) {
    %c0_i32 = arith.constant 0 : i32
    %c0_i32_0 = arith.constant 0 : i32
    return %arg0, %c0_i32 : i32, i32
  }
  func.func @transform_1(%arg0: i32) -> (i32, i32) {
    %c0_i32 = arith.constant 0 : i32
    %c0_i32_0 = arith.constant 0 : i32
    %c0_i32_1 = arith.constant 0 : i32
    return %c0_i32, %c0_i32_0 : i32, i32
  }
  func.func @transform_2(%arg0: i32) -> (i32, i32) {
    %c0_i32 = arith.constant 0 : i32
    %c0_i32_0 = arith.constant 0 : i32
    %c0_i32_1 = arith.constant 0 : i32
    return %c0_i32, %c0_i32_0 : i32, i32
  }
  func.func @transform_3(%arg0: i32) -> (i32, i32) {
    %c0_i32 = arith.constant 0 : i32
    %c0_i32_0 = arith.constant 0 : i32
    %c0_i32_1 = arith.constant 0 : i32
    return %c0_i32, %c0_i32_0 : i32, i32
  }
  func.func @transform_4(%arg0: i32) -> (i32, i32) {
    %c0_i32 = arith.constant 0 : i32
    %c0_i32_0 = arith.constant 0 : i32
    %c0_i32_1 = arith.constant 0 : i32
    return %c0_i32, %c0_i32_0 : i32, i32
  }
  func.func @transform_5(%arg0: i32) -> (i32, i32) {
    %c0_i32 = arith.constant 0 : i32
    %c0_i32_0 = arith.constant 0 : i32
    %c0_i32_1 = arith.constant 0 : i32
    return %c0_i32, %c0_i32_0 : i32, i32
  }
  func.func @transform_6(%arg0: i32) -> (i32, i32) {
    %c0_i32 = arith.constant 0 : i32
    %c0_i32_0 = arith.constant 0 : i32
    %c0_i32_1 = arith.constant 0 : i32
    return %c0_i32, %c0_i32_0 : i32, i32
  }
  func.func @transform_7(%arg0: i32) -> (i32, i32) {
    %c0_i32 = arith.constant 0 : i32
    %c0_i32_0 = arith.constant 0 : i32
    %c0_i32_1 = arith.constant 0 : i32
    return %c0_i32, %c0_i32_0 : i32, i32
  }
  func.func @transform_8(%arg0: i32) -> (i32, i32) {
    %c0_i32 = arith.constant 0 : i32
    %c0_i32_0 = arith.constant 0 : i32
    %c0_i32_1 = arith.constant 0 : i32
    return %c0_i32, %c0_i32_0 : i32, i32
  }
  func.func @transform_9(%arg0: i32) -> (i32, i32) {
    %c0_i32 = arith.constant 0 : i32
    %c0_i32_0 = arith.constant 0 : i32
    return %arg0, %c0_i32 : i32, i32
  }
}

</mosaic_0001>

<llo_original>
// kernel: mlp_autoencoder_forward.1
$region0: #{mlp_autoencoder_forward.1}
  #allocation0 [shape = 'u32[]', space=smem, size = 0x4, offset = 0x4, fixed_abs, tag = 'smem constant byte address 0x4 - core index']
  #allocation1 [shape = 'u32[72,128]{1,0:T(1,128)}', space=vmem, size = 0x9000, scoped, tag = 'internal scratch']
  %s0 = inlined_call_operand.vmem [shape: f32[8,187], index: 0, kind: input, shape index: {}]
  %s1 = inlined_call_operand.vmem [shape: f32[187,64], index: 1, kind: input, shape index: {}]
  %s2 = inlined_call_operand.vmem [shape: f32[1,64], index: 2, kind: input, shape index: {}]
  %s3 = inlined_call_operand.vmem [shape: f32[64,16], index: 3, kind: input, shape index: {}]
  %s4 = inlined_call_operand.vmem [shape: f32[1,16], index: 4, kind: input, shape index: {}]
  %s5 = inlined_call_operand.vmem [shape: f32[16,64], index: 5, kind: input, shape index: {}]
  %s6 = inlined_call_operand.vmem [shape: f32[1,64], index: 6, kind: input, shape index: {}]
  %s7 = inlined_call_operand.vmem [shape: f32[64,187], index: 7, kind: input, shape index: {}]
  %s8 = inlined_call_operand.vmem [shape: f32[1,187], index: 8, kind: input, shape index: {}]
  %s9 = inlined_call_operand.hbm [shape: f32[8,187], index: 9, kind: output, shape index: {}]
  %s10 = sld [smem:[#allocation0]]
  $region46: #{mlp_autoencoder_forward.1} parent=0
    _
  %s12 = ssub.s32 1, %s10
  %s13 = scalar_select 0, %s12, %s10
  $region1: #{mlp_autoencoder_forward.1} parent=0
    #allocation2 [shape = 'u8[8192]{0}', space=vmem, size = 0x2000, scoped, tag = 'output window, operand 0, single buffered']
    #allocation3 [shape = 's32[1]{0}', space=sflag, size = 0x4, scoped, tag = 'scoped memory for mlp_autoencoder_forward.1']
    %14 = vsyncpa [#allocation3], 0
    // Predicated region
    $region2: #{mlp_autoencoder_forward.1} parent=1 // pred_check
      _
    $region3: #{mlp_autoencoder_forward.1} parent=1 // pred_check_branch
      %16 = sbr.rel (0) target = $region5
    $region4: #{mlp_autoencoder_forward.1} parent=1 // pred_region
      _
    $region5: #{mlp_autoencoder_forward.1} parent=1 // pred_fallthru
      _
    // Predicated region
    $region6: #{mlp_autoencoder_forward.1} parent=1 // pred_check
      _
    $region7: #{mlp_autoencoder_forward.1} parent=1 // pred_check_branch
      %18 = sbr.rel (0) target = $region9
    $region8: #{mlp_autoencoder_forward.1} parent=1 // pred_region
      _
    $region9: #{mlp_autoencoder_forward.1} parent=1 // pred_fallthru
      _
    // Predicated region
    $region10: #{mlp_autoencoder_forward.1} parent=1 // pred_check
      _
    $region11: #{mlp_autoencoder_forward.1} parent=1 // pred_check_branch
      %20 = sbr.rel (0) target = $region13
    $region12: #{mlp_autoencoder_forward.1} parent=1 // pred_region
      _
    $region13: #{mlp_autoencoder_forward.1} parent=1 // pred_fallthru
      _
    // Predicated region
    $region14: #{mlp_autoencoder_forward.1} parent=1 // pred_check
      _
    $region15: #{mlp_autoencoder_forward.1} parent=1 // pred_check_branch
      %22 = sbr.rel (0) target = $region17
    $region16: #{mlp_autoencoder_forward.1} parent=1 // pred_region
      _
    $region17: #{mlp_autoencoder_forward.1} parent=1 // pred_fallthru
      _
    // Predicated region
    $region18: #{mlp_autoencoder_forward.1} parent=1 // pred_check
      _
    $region19: #{mlp_autoencoder_forward.1} parent=1 // pred_check_branch
      %24 = sbr.rel (0) target = $region21
    $region20: #{mlp_autoencoder_forward.1} parent=1 // pred_region
      _
    $region21: #{mlp_autoencoder_forward.1} parent=1 // pred_fallthru
      _
    // Predicated region
    $region22: #{mlp_autoencoder_forward.1} parent=1 // pred_check
      _
    $region23: #{mlp_autoencoder_forward.1} parent=1 // pred_check_branch
      %26 = sbr.rel (0) target = $region25
    $region24: #{mlp_autoencoder_forward.1} parent=1 // pred_region
      _
    $region25: #{mlp_autoencoder_forward.1} parent=1 // pred_fallthru
      _
    // Predicated region
    $region26: #{mlp_autoencoder_forward.1} parent=1 // pred_check
      _
    $region27: #{mlp_autoencoder_forward.1} parent=1 // pred_check_branch
      %28 = sbr.rel (0) target = $region29
    $region28: #{mlp_autoencoder_forward.1} parent=1 // pred_region
      _
    $region29: #{mlp_autoencoder_forward.1} parent=1 // pred_fallthru
      _
    // Predicated region
    $region30: #{mlp_autoencoder_forward.1} parent=1 // pred_check
      _
    $region31: #{mlp_autoencoder_forward.1} parent=1 // pred_check_branch
      %30 = sbr.rel (0) target = $region33
    $region32: #{mlp_autoencoder_forward.1} parent=1 // pred_region
      _
    $region33: #{mlp_autoencoder_forward.1} parent=1 // pred_fallthru
      _
    // Predicated region
    $region34: #{mlp_autoencoder_forward.1} parent=1 // pred_check
      _
    $region35: #{mlp_autoencoder_forward.1} parent=1 // pred_check_branch
      %32 = sbr.rel (0) target = $region37
    $region36: #{mlp_autoencoder_forward.1} parent=1 // pred_region
      _
    $region37: #{mlp_autoencoder_forward.1} parent=1 // pred_fallthru
      _
    %v33 = vld [vmem:[%s0] sm:$0xff]
    %v34 = vld [vmem:[%s0 + $0x8] sm:$0xff]
    %v35 = vld [vmem:[%s1] sm:$0xff]
    %v36 = vld [vmem:[%s1 + $0x8] sm:$0xff]
    %v37 = vld [vmem:[%s1 + $0x10] sm:$0xff]
    %v38 = vld [vmem:[%s1 + $0x18] sm:$0xff]
    %v39 = vld [vmem:[%s1 + $0x20] sm:$0xff]
    %v40 = vld [vmem:[%s1 + $0x28] sm:$0xff]
    %v41 = vld [vmem:[%s1 + $0x30] sm:$0xff]
    %v42 = vld [vmem:[%s1 + $0x38] sm:$0xff]
    %v43 = vld [vmem:[%s1 + $0x40] sm:$0xff]
    %v44 = vld [vmem:[%s1 + $0x48] sm:$0xff]
    %v45 = vld [vmem:[%s1 + $0x50] sm:$0xff]
    %v46 = vld [vmem:[%s1 + $0x58] sm:$0xff]
    %v47 = vld [vmem:[%s1 + $0x60] sm:$0xff]
    %v48 = vld [vmem:[%s1 + $0x68] sm:$0xff]
    %v49 = vld [vmem:[%s1 + $0x70] sm:$0xff]
    %v50 = vld [vmem:[%s1 + $0x78] sm:$0xff]
    %v51 = vld [vmem:[%s1 + $0x80] sm:$0xff]
    %v52 = vld [vmem:[%s1 + $0x88] sm:$0xff]
    %v53 = vld [vmem:[%s1 + $0x90] sm:$0xff]
    %v54 = vld [vmem:[%s1 + $0x98] sm:$0xff]
    %v55 = vld [vmem:[%s1 + $0xa0] sm:$0xff]
    %v56 = vld [vmem:[%s1 + $0xa8] sm:$0xff]
    %v57 = vld [vmem:[%s1 + $0xb0] sm:$0xff]
    %v58 = vld [vmem:[%s1 + $0xb8] sm:$0x7]
    %v59 = vld [vmem:[%s2] sm:$0x1]
    %v61 = vperm.slane %v59, 0
    %vm63 = vcmask 482304
    %v65 = vsel %vm63, %v34, 0
    %vm67 = vcmask 1042432
    %v69 = vsel %vm67, %v58, 0
    %71 = vmatpush.msra.mxu0 %v50
    %72 = vmatpush.msra.mxu0 %v49
    %73 = vmatpush.msra.mxu0 %v48
    %74 = vmatpush.msra.mxu0 %v47
    %75 = vmatpush.msra.mxu0 %v46
    %76 = vmatpush.msra.mxu0 %v45
    %77 = vmatpush.msra.mxu0 %v44
    %78 = vmatpush.msra.mxu0 %v43
    %79 = vmatpush.msra.mxu0 %v42
    %80 = vmatpush.msra.mxu0 %v41
    %81 = vmatpush.msra.mxu0 %v40
    %82 = vmatpush.msra.mxu0 %v39
    %83 = vmatpush.msra.mxu0 %v38
    %84 = vmatpush.msra.mxu0 %v37
    %85 = vmatpush.msra.mxu0 %v36
    %86 = vmatpush.msra.mxu0 %v35
    %87 = vmatmul.f32.gmra.mxu0 %v33
    %v88 = vpop.f32.mrf.mxu0
    %v89 = vadd.f32 %v61, %v88
    %90 = vdwg.mxu0
    %91 = vmatpush.msra.mxu0 0.0
    %92 = vmatpush.msra.mxu0 0.0
    %93 = vmatpush.msra.mxu0 0.0
    %94 = vmatpush.msra.mxu0 0.0
    %95 = vmatpush.msra.mxu0 0.0
    %96 = vmatpush.msra.mxu0 0.0
    %97 = vmatpush.msra.mxu0 0.0
    %98 = vmatpush.msra.mxu0 0.0
    %99 = vmatpush.msra.mxu0 %v69
    %100 = vmatpush.msra.mxu0 %v57
    %101 = vmatpush.msra.mxu0 %v56
    %102 = vmatpush.msra.mxu0 %v55
    %103 = vmatpush.msra.mxu0 %v54
    %104 = vmatpush.msra.mxu0 %v53
    %105 = vmatpush.msra.mxu0 %v52
    %106 = vmatpush.msra.mxu0 %v51
    %107 = vmatmul.f32.gmra.mxu0 %v65
    %v108 = vpop.f32.mrf.mxu0
    %v109 = vadd.f32 %v89, %v108
    %110 = vdwg.mxu0
    %v111 = vmul.f32 %v109, 0.5
    %v112 = vmul.f32 %v109, 0.70710677
    %v113 = vmul.f32 %v112, %v112
    %v114 = vmin.f32 16.0, %v113
    %v115 = vmul.f32 %v114, 2.1237322e-06
    %v116 = vadd.f32 %v115, 0.00028619796
    %v117 = vmul.f32 %v114, %v116
    %v118 = vadd.f32 %v117, 0.0036580483
    %v119 = vmul.f32 %v114, %v118
    %v120 = vadd.f32 %v119, 0.05243302
    %v121 = vmul.f32 %v114, %v120
    %v122 = vadd.f32 %v121, 0.18741608
    %v123 = vmul.f32 %v114, %v122
    %v124 = vadd.f32 %v123, 1.1283791
    %v125 = vmul.f32 %v112, %v124
    %v126 = vmul.f32 %v114, 3.8918573e-05
    %v127 = vadd.f32 %v126, 0.001143296
    %v128 = vmul.f32 %v114, %v127
    %v129 = vadd.f32 %v128, 0.014752088
    %v130 = vmul.f32 %v114, %v129
    %v131 = vadd.f32 %v130, 0.112945676
    %v132 = vmul.f32 %v114, %v131
    %v133 = vadd.f32 %v132, 0.4994258
    %v134 = vmul.f32 %v114, %v133
    %v135 = vadd.f32 %v134, 1.0
    %v136 = vrcp.pop %v135
    %v137 = vmul.f32 %v135, %v136
    %v138 = vsub.f32 1.0, %v137
    %v139 = vmul.f32 %v136, %v138
    %v140 = vadd.f32 %v136, %v139
    %vm141 = vweird.f32 %v135
    %vm142 = vweird.f32 %v136
    %vm143 = vmor %vm141, %vm142
    %v144 = vsel %vm143, %v136, %v140
    %v145 = vand.u32 2147483647, %v135
    %vm146 = vcmp.eq.f32.partialorder %v145, 8.507059e+37
    %v147 = vand.u32 %v135, 2147483648
    %v148 = vor.u32 1.1754944e-38, %v147
    %v149 = vsel %vm146, %v148, %v144
    %v150 = vmul.f32 %v125, %v149
    %v151 = vmin.f32 %v150, 1.0
    %v152 = vmax.f32 %v151, -1.0
    %v153 = vadd.f32 %v152, 1.0
    %v154 = vmul.f32 %v111, %v153
    %v155 = vld [vmem:[%s3] sm:$0xff]
    %v156 = vld [vmem:[%s3 + $0x8] sm:$0xff]
    %v157 = vld [vmem:[%s3 + $0x10] sm:$0xff]
    %v158 = vld [vmem:[%s3 + $0x18] sm:$0xff]
    %v159 = vld [vmem:[%s3 + $0x20] sm:$0xff]
    %v160 = vld [vmem:[%s3 + $0x28] sm:$0xff]
    %v161 = vld [vmem:[%s3 + $0x30] sm:$0xff]
    %v162 = vld [vmem:[%s3 + $0x38] sm:$0xff]
    %v163 = vld [vmem:[%s4] sm:$0x1]
    %v165 = vperm.slane %v163, 0
    %vm167 = vcmask 523264
    %v169 = vsel %vm167, %v154, 0
    %171 = vmatpush.msra.mxu0 0.0
    %172 = vmatpush.msra.mxu0 0.0
    %173 = vmatpush.msra.mxu0 0.0
    %174 = vmatpush.msra.mxu0 0.0
    %175 = vmatpush.msra.mxu0 0.0
    %176 = vmatpush.msra.mxu0 0.0
    %177 = vmatpush.msra.mxu0 0.0
    %178 = vmatpush.msra.mxu0 0.0
    %179 = vmatpush.msra.mxu0 %v162
    %180 = vmatpush.msra.mxu0 %v161
    %181 = vmatpush.msra.mxu0 %v160
    %182 = vmatpush.msra.mxu0 %v159
    %183 = vmatpush.msra.mxu0 %v158
    %184 = vmatpush.msra.mxu0 %v157
    %185 = vmatpush.msra.mxu0 %v156
    %186 = vmatpush.msra.mxu0 %v155
    %187 = vmatmul.f32.gmra.mxu0 %v169
    %v188 = vpop.f32.mrf.mxu0
    %v189 = vadd.f32 %v165, %v188
    %190 = vdwg.mxu0
    %v191 = vld [vmem:[%s5] sm:$0xff]
    %v192 = vld [vmem:[%s5 + $0x8] sm:$0xff]
    %v193 = vld [vmem:[%s6] sm:$0x1]
    %v195 = vperm.slane %v193, 0
    %vm197 = vcmask 130048
    %v199 = vsel %vm197, %v189, 0
    %201 = vmatpush.msra.mxu0 0.0
    %202 = vmatpush.msra.mxu0 0.0
    %203 = vmatpush.msra.mxu0 0.0
    %204 = vmatpush.msra.mxu0 0.0
    %205 = vmatpush.msra.mxu0 0.0
    %206 = vmatpush.msra.mxu0 0.0
    %207 = vmatpush.msra.mxu0 0.0
    %208 = vmatpush.msra.mxu0 0.0
    %209 = vmatpush.msra.mxu0 0.0
    %210 = vmatpush.msra.mxu0 0.0
    %211 = vmatpush.msra.mxu0 0.0
    %212 = vmatpush.msra.mxu0 0.0
    %213 = vmatpush.msra.mxu0 0.0
    %214 = vmatpush.msra.mxu0 0.0
    %215 = vmatpush.msra.mxu0 %v192
    %216 = vmatpush.msra.mxu0 %v191
    %217 = vmatmul.f32.gmra.mxu0 %v199
    %v218 = vpop.f32.mrf.mxu0
    %v219 = vadd.f32 %v195, %v218
    %220 = vdwg.mxu0
    %v221 = vmul.f32 %v219, 0.5
    %v222 = vmul.f32 %v219, 0.70710677
    %v223 = vmul.f32 %v222, %v222
    %v224 = vmin.f32 16.0, %v223
    %v225 = vmul.f32 %v224, 2.1237322e-06
    %v226 = vadd.f32 %v225, 0.00028619796
    %v227 = vmul.f32 %v224, %v226
    %v228 = vadd.f32 %v227, 0.0036580483
    %v229 = vmul.f32 %v224, %v228
    %v230 = vadd.f32 %v229, 0.05243302
    %v231 = vmul.f32 %v224, %v230
    %v232 = vadd.f32 %v231, 0.18741608
    %v233 = vmul.f32 %v224, %v232
    %v234 = vadd.f32 %v233, 1.1283791
    %v235 = vmul.f32 %v222, %v234
    %v236 = vmul.f32 %v224, 3.8918573e-05
    %v237 = vadd.f32 %v236, 0.001143296
    %v238 = vmul.f32 %v224, %v237
    %v239 = vadd.f32 %v238, 0.014752088
    %v240 = vmul.f32 %v224, %v239
    %v241 = vadd.f32 %v240, 0.112945676
    %v242 = vmul.f32 %v224, %v241
    %v243 = vadd.f32 %v242, 0.4994258
    %v244 = vmul.f32 %v224, %v243
    %v245 = vadd.f32 %v244, 1.0
    %v246 = vrcp.pop %v245
    %v247 = vmul.f32 %v245, %v246
    %v248 = vsub.f32 1.0, %v247
    %v249 = vmul.f32 %v246, %v248
    %v250 = vadd.f32 %v246, %v249
    %vm251 = vweird.f32 %v245
    %vm252 = vweird.f32 %v246
    %vm253 = vmor %vm251, %vm252
    %v254 = vsel %vm253, %v246, %v250
    %v255 = vand.u32 2147483647, %v245
    %vm256 = vcmp.eq.f32.partialorder %v255, 8.507059e+37
    %v257 = vand.u32 %v245, 2147483648
    %v258 = vor.u32 1.1754944e-38, %v257
    %v259 = vsel %vm256, %v258, %v254
    %v260 = vmul.f32 %v235, %v259
    %v261 = vmin.f32 %v260, 1.0
    %v262 = vmax.f32 %v261, -1.0
    %v263 = vadd.f32 %v262, 1.0
    %v264 = vmul.f32 %v221, %v263
    %v265 = vld [vmem:[%s7] sm:$0xff]
    %v266 = vld [vmem:[%s7 + $0x8] sm:$0xff]
    %v267 = vld [vmem:[%s7 + $0x10] sm:$0xff]
    %v268 = vld [vmem:[%s7 + $0x18] sm:$0xff]
    %v269 = vld [vmem:[%s7 + $0x20] sm:$0xff]
    %v270 = vld [vmem:[%s7 + $0x28] sm:$0xff]
    %v271 = vld [vmem:[%s7 + $0x30] sm:$0xff]
    %v272 = vld [vmem:[%s7 + $0x38] sm:$0xff]
    %v273 = vld [vmem:[%s7 + $0x40] sm:$0xff]
    %v274 = vld [vmem:[%s7 + $0x48] sm:$0xff]
    %v275 = vld [vmem:[%s7 + $0x50] sm:$0xff]
    %v276 = vld [vmem:[%s7 + $0x58] sm:$0xff]
    %v277 = vld [vmem:[%s7 + $0x60] sm:$0xff]
    %v278 = vld [vmem:[%s7 + $0x68] sm:$0xff]
    %v279 = vld [vmem:[%s7 + $0x70] sm:$0xff]
    %v280 = vld [vmem:[%s7 + $0x78] sm:$0xff]
    %v281 = vld [vmem:[%s8] sm:$0x3]
    %v283 = vperm.slane %v281, 0
    %v284 = vperm.slane %v281, 1
    %v288 = vsel %vm167, %v264, 0
    %290 = vmatpush.msra.mxu0 0.0
    %291 = vmatpush.msra.mxu0 0.0
    %292 = vmatpush.msra.mxu0 0.0
    %293 = vmatpush.msra.mxu0 0.0
    %294 = vmatpush.msra.mxu0 0.0
    %295 = vmatpush.msra.mxu0 0.0
    %296 = vmatpush.msra.mxu0 0.0
    %297 = vmatpush.msra.mxu0 0.0
    %298 = vmatpush.msra.mxu0 %v279
    %299 = vmatpush.msra.mxu0 %v277
    %300 = vmatpush.msra.mxu0 %v275
    %301 = vmatpush.msra.mxu0 %v273
    %302 = vmatpush.msra.mxu0 %v271
    %303 = vmatpush.msra.mxu0 %v269
    %304 = vmatpush.msra.mxu0 %v267
    %305 = vmatpush.msra.mxu0 %v265
    %306 = vmatmul.f32.gmra.mxu0 %v288
    %v307 = vpop.f32.mrf.mxu0
    %v308 = vadd.f32 %v283, %v307
    %309 = vdwg.mxu0
    %310 = vmatpush.msra.mxu0 0.0
    %311 = vmatpush.msra.mxu0 0.0
    %312 = vmatpush.msra.mxu0 0.0
    %313 = vmatpush.msra.mxu0 0.0
    %314 = vmatpush.msra.mxu0 0.0
    %315 = vmatpush.msra.mxu0 0.0
    %316 = vmatpush.msra.mxu0 0.0
    %317 = vmatpush.msra.mxu0 0.0
    %318 = vmatpush.msra.mxu0 %v280
    %319 = vmatpush.msra.mxu0 %v278
    %320 = vmatpush.msra.mxu0 %v276
    %321 = vmatpush.msra.mxu0 %v274
    %322 = vmatpush.msra.mxu0 %v272
    %323 = vmatpush.msra.mxu0 %v270
    %324 = vmatpush.msra.mxu0 %v268
    %325 = vmatpush.msra.mxu0 %v266
    %326 = vmatmul.f32.gmra.mxu0 %v288
    %v327 = vpop.f32.mrf.mxu0
    %v328 = vadd.f32 %v284, %v327
    %329 = vdwg.mxu0
    %330 = vst [vmem:[#allocation2] sm:$0xff] %v308
    %331 = vst.msk [vmem:[#allocation2 + $0x8] sm:$0xff] %vm63, %v328
    // Predicated region
    $region38: #{mlp_autoencoder_forward.1} parent=1 // pred_check
      _
    $region39: #{mlp_autoencoder_forward.1} parent=1 // pred_check_branch
      %333 = sbr.rel (0) target = $region41
    $region40: #{mlp_autoencoder_forward.1} parent=1 // pred_region
      %335 = vsyncadd [#allocation3], 0
      %s337 = sshll.u32 [#allocation2], 4
      %s338 = int_to_ptr.vmem [resolvable:$true] %s337
      %s339 = sshll.u32 %s9, 4
      %s340 = int_to_ptr.hbm [resolvable:$true] %s339
      %342 = dma.vmem_to_hbm [thread:$0]  %s338, 256, %s340, [#allocation3]
    $region41: #{mlp_autoencoder_forward.1} parent=1 // pred_fallthru
      _
    // Predicated region
    $region42: #{mlp_autoencoder_forward.1} parent=1 // pred_check
      _
    $region43: #{mlp_autoencoder_forward.1} parent=1 // pred_check_branch
      %344 = sbr.rel (0) target = $region45
    $region44: #{mlp_autoencoder_forward.1} parent=1 // pred_region
      %346 = dma.done [#allocation3], 256
    $region45: #{mlp_autoencoder_forward.1} parent=1 // pred_fallthru
      _
    %347 = vsyncpa [#allocation3], 1

</llo_original>
